<compile_context>
chip_gen: v5e
topology: v5e:2x2
jax: 0.10.0
libtpu: 0.0.40
codegen_flags: <defaults>
</compile_context>

<pallas_src>
import functools
import math

import jax
import jax.numpy as jnp
from jax.experimental import pallas as pl
from jax.experimental.pallas import tpu as pltpu

EPS = 1e-5
EXPANSION = 4


def _round_up(x, m):
    return (x + m - 1) // m * m


def _pick_tile(dim, candidates):
    for c in candidates:
        if dim >= c and dim % c == 0:
            return c
    return None


def _vmem_limit(block_bytes):
    # double-buffer headroom, clamped to stay safe on v7x (64 MiB physical VMEM)
    return int(min(max(2 * block_bytes + (4 << 20), 16 << 20), 48 << 20))


# ----------------------------------------------------------------------------
# Pallas kernels
# ----------------------------------------------------------------------------
def _mm_kernel(x_ref, w_ref, b_ref, *rest, relu, has_res):
    """acc += X @ W over the K grid axis; epilogue: + bias [+ residual] [ReLU]."""
    if has_res:
        r_ref, o_ref, acc_ref = rest
    else:
        o_ref, acc_ref = rest
        r_ref = None

    k = pl.program_id(1)

    @pl.when(k == 0)
    def _():
        acc_ref[...] = jnp.zeros_like(acc_ref)

    acc_ref[...] += jnp.dot(x_ref[...], w_ref[...],
                            preferred_element_type=jnp.float32)

    @pl.when(k == pl.num_programs(1) - 1)
    def _():
        y = acc_ref[...] + b_ref[...]
        if has_res:
            y = y + r_ref[...].astype(jnp.float32)
        if relu:
            y = jnp.maximum(y, 0.0)
        o_ref[...] = y.astype(o_ref.dtype)


def _conv3x3_kernel(x_ref, w_ref, b_ref, o_ref, *, relu):
    """3x3 / stride-1 conv for one halo-padded image: 9 shifted matmuls, fp32 acc,
    fused BN bias + ReLU epilogue. No im2col patch matrix is ever materialized."""
    _, hp, wp, cin = x_ref.shape
    h, w = hp - 2, wp - 2
    cout = o_ref.shape[3]

    slab = x_ref[0]                                  # (hp, wp, cin), read once
    acc = jnp.zeros((h * w, cout), jnp.float32)
    for dy in range(3):
        for dx in range(3):
            win = slab[dy:dy + h, dx:dx + w, :]      # shifted window (h, w, cin)
            acc = acc + jnp.dot(win.reshape(h * w, cin), w_ref[3 * dy + dx],
                                preferred_element_type=jnp.float32)
    y = acc + b_ref[...]
    if relu:
        y = jnp.maximum(y, 0.0)
    o_ref[...] = y.reshape(1, h, w, cout).astype(o_ref.dtype)


# ----------------------------------------------------------------------------
# Pallas wrappers
# ----------------------------------------------------------------------------
def matmul_bias_act(x, w, bias, residual=None, relu=False, out_dtype=jnp.bfloat16):
    """out = act((x @ w) + bias [+ residual]); bf16 MXU inputs, fp32 accumulation."""
    M, K = x.shape
    N = w.shape[1]

    x = x.astype(jnp.bfloat16)
    w = w.astype(jnp.bfloat16)
    b2 = bias.reshape(1, N).astype(jnp.float32)
    has_res = residual is not None
    if has_res:
        residual = residual.astype(jnp.bfloat16)

    # M tiling: pick a divisor tile so no padding is needed in the common case.
    Mp = M if M % 8 == 0 else _round_up(M, 8)
    if Mp != M:
        x = jnp.pad(x, ((0, Mp - M), (0, 0)))
        if has_res:
            residual = jnp.pad(residual, ((0, Mp - M), (0, 0)))
    tm = _pick_tile(Mp, (1024, 512, 256, 128, 64, 32, 16, 8))
    # Adaptive K tile: full-K block when K is not a nice multiple (no zero padding).
    tk = _pick_tile(K, (512, 256, 128)) or K

    grid = (Mp // tm, K // tk)
    in_specs = [
        pl.BlockSpec((tm, tk), lambda m, k: (m, k)),
        pl.BlockSpec((tk, N), lambda m, k: (k, 0)),
        pl.BlockSpec((1, N), lambda m, k: (0, 0)),
    ]
    args = [x, w, b2]
    if has_res:
        in_specs.append(pl.BlockSpec((tm, N), lambda m, k: (m, 0)))
        args.append(residual)

    block_bytes = (tm * tk * 2 + tk * N * 2 + N * 4
                   + tm * N * 2 * (1 + int(has_res)) + tm * N * 4)

    out = pl.pallas_call(
        functools.partial(_mm_kernel, relu=relu, has_res=has_res),
        out_shape=jax.ShapeDtypeStruct((Mp, N), out_dtype),
        grid_spec=pltpu.PrefetchScalarGridSpec(
            num_scalar_prefetch=0,
            grid=grid,
            in_specs=in_specs,
            out_specs=pl.BlockSpec((tm, N), lambda m, k: (m, 0)),
            scratch_shapes=[pltpu.VMEM((tm, N), jnp.float32)],
        ),
        compiler_params=pltpu.CompilerParams(
            dimension_semantics=("parallel", "arbitrary"),
            vmem_limit_bytes=_vmem_limit(block_bytes),
        ),
    )(*args)
    return out[:M] if Mp != M else out


def _fold_bn(bn, conv_bias):
    gamma, beta, mean, var = bn
    scale = gamma * jax.lax.rsqrt(var + EPS)
    bias = beta - mean * scale
    if conv_bias is not None:
        bias = bias + conv_bias * scale
    return scale, bias


def conv1x1_bn(x, w_oihw, bn, stride=1, residual=None, relu=False,
               out_dtype=jnp.bfloat16):
    """1x1 conv (bias=False) + folded BN (+ residual) (+ ReLU) as a single fused matmul."""
    if stride != 1:
        x = x[:, ::stride, ::stride, :]
    n, h, w_, cin = x.shape
    cout = w_oihw.shape[0]
    scale, bias = _fold_bn(bn, None)
    wmat = w_oihw.reshape(cout, cin).T * scale[None, :]     # fold BN scale into W
    x2 = x.reshape(n * h * w_, cin)
    r2 = None if residual is None else residual.reshape(n * h * w_, cout)
    out2 = matmul_bias_act(x2, wmat, bias, residual=r2, relu=relu,
                           out_dtype=out_dtype)
    return out2.reshape(n, h, w_, cout)


def conv3x3_bn(x, w_oihw, conv_bias, bn, stride=1, relu=True,
               out_dtype=jnp.bfloat16):
    """3x3 conv (with bias) + folded BN + ReLU. One halo pad; no im2col replication."""
    n, h, w_, cin = x.shape
    cout = w_oihw.shape[0]
    scale, bias = _fold_bn(bn, conv_bias)
    wt = (jnp.transpose(w_oihw, (2, 3, 1, 0)).reshape(9, cin, cout)
          * scale[None, None, :]).astype(jnp.bfloat16)      # tap order (kh, kw)
    b2 = bias.reshape(1, cout).astype(jnp.float32)

    xp = jnp.pad(x.astype(jnp.bfloat16), ((0, 0), (1, 1), (1, 1), (0, 0)))
    hp, wp = h + 2, w_ + 2

    block_bytes = (hp * wp * cin * 2 + 9 * cin * cout * 2 + cout * 4
                   + h * w_ * cout * 2 + h * w_ * cout * 4)

    out = pl.pallas_call(
        functools.partial(_conv3x3_kernel, relu=relu),
        out_shape=jax.ShapeDtypeStruct((n, h, w_, cout), out_dtype),
        grid_spec=pltpu.PrefetchScalarGridSpec(
            num_scalar_prefetch=0,
            grid=(n,),
            in_specs=[
                pl.BlockSpec((1, hp, wp, cin), lambda i: (i, 0, 0, 0)),
                pl.BlockSpec((9, cin, cout), lambda i: (0, 0, 0)),
                pl.BlockSpec((1, cout), lambda i: (0, 0)),
            ],
            out_specs=pl.BlockSpec((1, h, w_, cout), lambda i: (i, 0, 0, 0)),
        ),
        compiler_params=pltpu.CompilerParams(
            dimension_semantics=("parallel",),
            vmem_limit_bytes=_vmem_limit(block_bytes),
        ),
    )(xp, wt, b2)

    if stride != 1:
        # TODO(synk): stride>1 computed at stride 1 and subsampled (exact, but overcomputes).
        out = out[:, ::stride, ::stride, :]
    return out


# ----------------------------------------------------------------------------
# Parameters (mirrors Bottleneck.__init__ shapes; BN in eval mode with default init)
# ----------------------------------------------------------------------------
def make_bottleneck_params(key, in_planes, planes, stride=1, groups=1,
                           base_width=64, with_downsample=None):
    assert groups == 1, "only groups=1 supported"
    width = int(planes * (base_width / 64.0)) * groups
    out_planes = planes * EXPANSION
    if with_downsample is None:
        with_downsample = (stride != 1) or (in_planes != out_planes)
    ks = iter(jax.random.split(key, 8))

    def conv_w(k, cout, cin, kh, kw):
        std = math.sqrt(2.0 / (cout * kh * kw))
        return jax.random.normal(k, (cout, cin, kh, kw), jnp.float32) * std

    def bn_params(c):
        return (jnp.ones((c,), jnp.float32), jnp.zeros((c,), jnp.float32),
                jnp.zeros((c,), jnp.float32), jnp.ones((c,), jnp.float32))

    p = {"stride": stride}
    p["conv1_w"] = conv_w(next(ks), width, in_planes, 1, 1)       # conv1x1: bias=False
    p["bn1"] = bn_params(width)
    p["conv2_w"] = conv_w(next(ks), width, width, 3, 3)           # conv3x3: bias=True
    bound = 1.0 / math.sqrt(width * 9)
    p["conv2_b"] = jax.random.uniform(next(ks), (width,), jnp.float32, -bound, bound)
    p["bn2"] = bn_params(width)
    p["conv3_w"] = conv_w(next(ks), out_planes, width, 1, 1)      # conv1x1: bias=False
    p["bn3"] = bn_params(out_planes)
    if with_downsample:
        p["down_w"] = conv_w(next(ks), out_planes, in_planes, 1, 1)
        p["down_bn"] = bn_params(out_planes)
    else:
        p["down_w"] = None
        p["down_bn"] = None
    return p


# ----------------------------------------------------------------------------
# Bottleneck forward
# ----------------------------------------------------------------------------
def bottleneck_forward(params, x_nchw):
    x = jnp.transpose(x_nchw, (0, 2, 3, 1)).astype(jnp.float32)   # NCHW -> NHWC
    stride = params["stride"]

    out = conv1x1_bn(x, params["conv1_w"], params["bn1"], relu=True)
    out = conv3x3_bn(out, params["conv2_w"], params["conv2_b"], params["bn2"],
                     stride=stride, relu=True)
    if params["down_w"] is not None:
        identity = conv1x1_bn(x, params["down_w"], params["down_bn"],
                              stride=stride, relu=False)
    else:
        identity = x
    # conv3 + bn3 + residual add + relu fused into one kernel epilogue
    out = conv1x1_bn(out, params["conv3_w"], params["bn3"],
                     residual=identity, relu=True, out_dtype=jnp.float32)
    return jnp.transpose(out, (0, 3, 1, 2))                       # NHWC -> NCHW


if __name__ == "__main__":
    key = jax.random.PRNGKey(0)
    k_p, k_p2, k_x = jax.random.split(key, 3)

    # Canonical config: stride=1, downsample=None (requires in_planes == planes * 4).
    N, C, H, W = 2, 64, 16, 16
    planes = 16
    params = make_bottleneck_params(k_p, in_planes=C, planes=planes, stride=1)
    x = jax.random.normal(k_x, (N, C, H, W), jnp.float32)
    y = bottleneck_forward(params, x)
    jax.block_until_ready(y)
    assert y.shape == (N, planes * EXPANSION, H, W)
    assert bool(jnp.all(jnp.isfinite(y)))

    # Strided Bottleneck with the standard 1x1-conv+BN downsample on the identity path.
    params2 = make_bottleneck_params(k_p2, in_planes=C, planes=planes, stride=2)
    y2 = bottleneck_forward(params2, x)
    jax.block_until_ready(y2)
    assert y2.shape == (N, planes * EXPANSION, H // 2, W // 2)
    assert bool(jnp.all(jnp.isfinite(y2)))

    print("KERNEL_OK")
</pallas_src>

<mosaic_0001>
module attributes {stable_mosaic.version = 11 : i64} {
  func.func @_mm_kernel(%arg0: i32, %arg1: i32, %arg2: memref<512x64xbf16, #tpu.memory_space<vmem>>, %arg3: memref<64x16xbf16, #tpu.memory_space<vmem>>, %arg4: memref<1x16xf32, #tpu.memory_space<vmem>>, %arg5: memref<512x16xbf16, #tpu.memory_space<vmem>>, %arg6: memref<512x16xf32, #tpu.memory_space<vmem>>) attributes {dimension_semantics = [#tpu.dimension_semantics<parallel>, #tpu.dimension_semantics<arbitrary>], iteration_bounds = array<i64: 1, 1>, scalar_prefetch = 0 : i64, scratch_operands = 1 : i64, tpu.core_type = #tpu.core_type<tc>, window_params = [{transform_indices = @transform_0, window_bounds = array<i64: 512, 64>}, {transform_indices = @transform_1, window_bounds = array<i64: 64, 16>}, {pipeline_mode = #tpu.pipeline_mode<synchronous>, transform_indices = @transform_2, window_bounds = array<i64: 1, 16>}, {transform_indices = @transform_3, window_bounds = array<i64: 512, 16>}]} {
    %c0_i32 = arith.constant 0 : i32
    %0 = arith.cmpi eq, %arg1, %c0_i32 : i32
    %1 = arith.extui %0 : i1 to i32
    %c0_i32_0 = arith.constant 0 : i32
    %2 = arith.cmpi ne, %1, %c0_i32_0 : i32
    scf.if %2 {
      %cst_10 = arith.constant 0.000000e+00 : f32
      %12 = vector.broadcast %cst_10 : f32 to vector<512x16xf32>
      %c0_11 = arith.constant 0 : index
      %c0_12 = arith.constant 0 : index
      %13 = vector.load %arg6[%c0_11, %c0_12] : memref<512x16xf32, #tpu.memory_space<vmem>>, vector<512x16xf32>
      tpu.vector_store %arg6[%c0_11, %c0_12], %12 {strides = array<i32>} : memref<512x16xf32, #tpu.memory_space<vmem>>, vector<512x16xf32>,
    } else {
    }
    %c0 = arith.constant 0 : index
    %c0_1 = arith.constant 0 : index
    %3 = vector.load %arg6[%c0, %c0_1] : memref<512x16xf32, #tpu.memory_space<vmem>>, vector<512x16xf32>
    %c0_2 = arith.constant 0 : index
    %c0_3 = arith.constant 0 : index
    %4 = vector.load %arg2[%c0_2, %c0_3] : memref<512x64xbf16, #tpu.memory_space<vmem>>, vector<512x64xbf16>
    %c0_4 = arith.constant 0 : index
    %c0_5 = arith.constant 0 : index
    %5 = vector.load %arg3[%c0_4, %c0_5] : memref<64x16xbf16, #tpu.memory_space<vmem>>, vector<64x16xbf16>
    %cst = arith.constant dense<0.000000e+00> : vector<512x16xf32>
    %6 = tpu.matmul %4, %5, %cst {dimension_numbers = #tpu.dot_dimension_numbers<[1], [0], [0], [1], [0, 0, 1, 1], [], []>} : vector<512x64xbf16>, vector<64x16xbf16>, vector<512x16xf32> -> vector<512x16xf32>
    %7 = arith.addf %3, %6 : vector<512x16xf32>
    %c0_6 = arith.constant 0 : index
    %c0_7 = arith.constant 0 : index
    %8 = vector.load %arg6[%c0_6, %c0_7] : memref<512x16xf32, #tpu.memory_space<vmem>>, vector<512x16xf32>
    tpu.vector_store %arg6[%c0_6, %c0_7], %7 {strides = array<i32>} : memref<512x16xf32, #tpu.memory_space<vmem>>, vector<512x16xf32>,
    %c0_i32_8 = arith.constant 0 : i32
    %9 = arith.cmpi eq, %arg1, %c0_i32_8 : i32
    %10 = arith.extui %9 : i1 to i32
    %c0_i32_9 = arith.constant 0 : i32
    %11 = arith.cmpi ne, %10, %c0_i32_9 : i32
    scf.if %11 {
      %c0_10 = arith.constant 0 : index
      %c0_11 = arith.constant 0 : index
      %12 = vector.load %arg6[%c0_10, %c0_11] : memref<512x16xf32, #tpu.memory_space<vmem>>, vector<512x16xf32>
      %c0_12 = arith.constant 0 : index
      %c0_13 = arith.constant 0 : index
      %13 = vector.load %arg4[%c0_12, %c0_13] : memref<1x16xf32, #tpu.memory_space<vmem>>, vector<1x16xf32>
      %14 = vector.broadcast %13 : vector<1x16xf32> to vector<512x16xf32>
      %15 = arith.addf %12, %14 : vector<512x16xf32>
      %cst_14 = arith.constant 0.000000e+00 : f32
      %16 = vector.broadcast %cst_14 : f32 to vector<512x16xf32>
      %17 = arith.maximumf %15, %16 : vector<512x16xf32>
      %18 = arith.truncf %17 : vector<512x16xf32> to vector<512x16xbf16>
      %c0_15 = arith.constant 0 : index
      %c0_16 = arith.constant 0 : index
      %19 = vector.load %arg5[%c0_15, %c0_16] : memref<512x16xbf16, #tpu.memory_space<vmem>>, vector<512x16xbf16>
      tpu.vector_store %arg5[%c0_15, %c0_16], %18 {strides = array<i32>} : memref<512x16xbf16, #tpu.memory_space<vmem>>, vector<512x16xbf16>,
    } else {
    }
    return
  }
  func.func @transform_0(%arg0: i32, %arg1: i32) -> (i32, i32) {
    %c0_i32 = arith.constant 0 : i32
    return %arg0, %arg1 : i32, i32
  }
  func.func @transform_1(%arg0: i32, %arg1: i32) -> (i32, i32) {
    %c0_i32 = arith.constant 0 : i32
    %c0_i32_0 = arith.constant 0 : i32
    return %arg1, %c0_i32 : i32, i32
  }
  func.func @transform_2(%arg0: i32, %arg1: i32) -> (i32, i32) {
    %c0_i32 = arith.constant 0 : i32
    %c0_i32_0 = arith.constant 0 : i32
    %c0_i32_1 = arith.constant 0 : i32
    return %c0_i32, %c0_i32_0 : i32, i32
  }
  func.func @transform_3(%arg0: i32, %arg1: i32) -> (i32, i32) {
    %c0_i32 = arith.constant 0 : i32
    %c0_i32_0 = arith.constant 0 : i32
    return %arg0, %c0_i32 : i32, i32
  }
}

</mosaic_0001>

<llo_original>
// kernel: tpu_custom_call.1
$region0: #{tpu_custom_call.1}
  #allocation0 [shape = 'u32[]', space=smem, size = 0x4, offset = 0x4, fixed_abs, tag = 'smem constant byte address 0x4 - core index']
  #allocation1 [shape = 'u32[72,128]{1,0:T(1,128)}', space=vmem, size = 0x9000, scoped, tag = 'internal scratch']
  #allocation2 [shape = 'f32[512,16]{1,0:T(8,128)}', space=vmem, size = 0x40000, scoped, tag = 'scratch operand']
  %s0 = inlined_call_operand.vmem [shape: bf16[512,64], index: 0, kind: input, shape index: {}]
  %s1 = inlined_call_operand.vmem [shape: bf16[64,16], index: 1, kind: input, shape index: {}]
  %s2 = inlined_call_operand.vmem [shape: f32[1,16], index: 2, kind: input, shape index: {}]
  %s3 = inlined_call_operand.vmem [shape: bf16[512,16], index: 3, kind: output, shape index: {}]
  %s4 = sld [smem:[#allocation0]]
  $region30: #{tpu_custom_call.1} parent=0
    _
  %s6 = ssub.s32 1, %s4
  %s7 = scalar_select 0, %s6, %s4
  // Predicated region
  $region2: #{tpu_custom_call.1} parent=0 // pred_check
    _
  $region3: #{tpu_custom_call.1} parent=0 // pred_check_branch
    %9 = sbr.rel (0) target = $region5
  $region4: #{tpu_custom_call.1} parent=0 // pred_region
    _
  $region5: #{tpu_custom_call.1} parent=0 // pred_fallthru
    _
  // Predicated region
  $region6: #{tpu_custom_call.1} parent=0 // pred_check
    _
  $region7: #{tpu_custom_call.1} parent=0 // pred_check_branch
    %11 = sbr.rel (0) target = $region9
  $region8: #{tpu_custom_call.1} parent=0 // pred_region
    _
  $region9: #{tpu_custom_call.1} parent=0 // pred_fallthru
    _
  // Predicated region
  $region10: #{tpu_custom_call.1} parent=0 // pred_check
    _
  $region11: #{tpu_custom_call.1} parent=0 // pred_check_branch
    %13 = sbr.rel (0) target = $region13
  $region12: #{tpu_custom_call.1} parent=0 // pred_region
    _
  $region13: #{tpu_custom_call.1} parent=0 // pred_fallthru
    _
  %p15 = scmp.eq.s32.totalorder 0, 0
  // Predicated region
  $region14: #{tpu_custom_call.1} parent=0 // pred_check
    %p16 = pneg %p15
  $region15: #{tpu_custom_call.1} parent=0 // pred_check_branch
    %18 = sbr.rel (%p16) target = $region17
  $region16: #{tpu_custom_call.1} parent=0 // pred_region
    %vm19 = vcmask 130048
    %20 = vst.msk [vmem:[#allocation2] sm:$0xff] %vm19, 0.0
    %21 = vst.msk [vmem:[#allocation2 + $0x8] sm:$0xff] %vm19, 0.0
    %22 = vst.msk [vmem:[#allocation2 + $0x10] sm:$0xff] %vm19, 0.0
    %23 = vst.msk [vmem:[#allocation2 + $0x18] sm:$0xff] %vm19, 0.0
    %24 = vst.msk [vmem:[#allocation2 + $0x20] sm:$0xff] %vm19, 0.0
    %25 = vst.msk [vmem:[#allocation2 + $0x28] sm:$0xff] %vm19, 0.0
    %26 = vst.msk [vmem:[#allocation2 + $0x30] sm:$0xff] %vm19, 0.0
    %27 = vst.msk [vmem:[#allocation2 + $0x38] sm:$0xff] %vm19, 0.0
    %28 = vst.msk [vmem:[#allocation2 + $0x40] sm:$0xff] %vm19, 0.0
    %29 = vst.msk [vmem:[#allocation2 + $0x48] sm:$0xff] %vm19, 0.0
    %30 = vst.msk [vmem:[#allocation2 + $0x50] sm:$0xff] %vm19, 0.0
    %31 = vst.msk [vmem:[#allocation2 + $0x58] sm:$0xff] %vm19, 0.0
    %32 = vst.msk [vmem:[#allocation2 + $0x60] sm:$0xff] %vm19, 0.0
    %33 = vst.msk [vmem:[#allocation2 + $0x68] sm:$0xff] %vm19, 0.0
    %34 = vst.msk [vmem:[#allocation2 + $0x70] sm:$0xff] %vm19, 0.0
    %35 = vst.msk [vmem:[#allocation2 + $0x78] sm:$0xff] %vm19, 0.0
    %36 = vst.msk [vmem:[#allocation2 + $0x80] sm:$0xff] %vm19, 0.0
    %37 = vst.msk [vmem:[#allocation2 + $0x88] sm:$0xff] %vm19, 0.0
    %38 = vst.msk [vmem:[#allocation2 + $0x90] sm:$0xff] %vm19, 0.0
    %39 = vst.msk [vmem:[#allocation2 + $0x98] sm:$0xff] %vm19, 0.0
    %40 = vst.msk [vmem:[#allocation2 + $0xa0] sm:$0xff] %vm19, 0.0
    %41 = vst.msk [vmem:[#allocation2 + $0xa8] sm:$0xff] %vm19, 0.0
    %42 = vst.msk [vmem:[#allocation2 + $0xb0] sm:$0xff] %vm19, 0.0
    %43 = vst.msk [vmem:[#allocation2 + $0xb8] sm:$0xff] %vm19, 0.0
    %44 = vst.msk [vmem:[#allocation2 + $0xc0] sm:$0xff] %vm19, 0.0
    %45 = vst.msk [vmem:[#allocation2 + $0xc8] sm:$0xff] %vm19, 0.0
    %46 = vst.msk [vmem:[#allocation2 + $0xd0] sm:$0xff] %vm19, 0.0
    %47 = vst.msk [vmem:[#allocation2 + $0xd8] sm:$0xff] %vm19, 0.0
    %48 = vst.msk [vmem:[#allocation2 + $0xe0] sm:$0xff] %vm19, 0.0
    %49 = vst.msk [vmem:[#allocation2 + $0xe8] sm:$0xff] %vm19, 0.0
    %50 = vst.msk [vmem:[#allocation2 + $0xf0] sm:$0xff] %vm19, 0.0
    %51 = vst.msk [vmem:[#allocation2 + $0xf8] sm:$0xff] %vm19, 0.0
    %52 = vst.msk [vmem:[#allocation2 + $0x100] sm:$0xff] %vm19, 0.0
    %53 = vst.msk [vmem:[#allocation2 + $0x108] sm:$0xff] %vm19, 0.0
    %54 = vst.msk [vmem:[#allocation2 + $0x110] sm:$0xff] %vm19, 0.0
    %55 = vst.msk [vmem:[#allocation2 + $0x118] sm:$0xff] %vm19, 0.0
    %56 = vst.msk [vmem:[#allocation2 + $0x120] sm:$0xff] %vm19, 0.0
    %57 = vst.msk [vmem:[#allocation2 + $0x128] sm:$0xff] %vm19, 0.0
    %58 = vst.msk [vmem:[#allocation2 + $0x130] sm:$0xff] %vm19, 0.0
    %59 = vst.msk [vmem:[#allocation2 + $0x138] sm:$0xff] %vm19, 0.0
    %60 = vst.msk [vmem:[#allocation2 + $0x140] sm:$0xff] %vm19, 0.0
    %61 = vst.msk [vmem:[#allocation2 + $0x148] sm:$0xff] %vm19, 0.0
    %62 = vst.msk [vmem:[#allocation2 + $0x150] sm:$0xff] %vm19, 0.0
    %63 = vst.msk [vmem:[#allocation2 + $0x158] sm:$0xff] %vm19, 0.0
    %64 = vst.msk [vmem:[#allocation2 + $0x160] sm:$0xff] %vm19, 0.0
    %65 = vst.msk [vmem:[#allocation2 + $0x168] sm:$0xff] %vm19, 0.0
    %66 = vst.msk [vmem:[#allocation2 + $0x170] sm:$0xff] %vm19, 0.0
    %67 = vst.msk [vmem:[#allocation2 + $0x178] sm:$0xff] %vm19, 0.0
    %68 = vst.msk [vmem:[#allocation2 + $0x180] sm:$0xff] %vm19, 0.0
    %69 = vst.msk [vmem:[#allocation2 + $0x188] sm:$0xff] %vm19, 0.0
    %70 = vst.msk [vmem:[#allocation2 + $0x190] sm:$0xff] %vm19, 0.0
    %71 = vst.msk [vmem:[#allocation2 + $0x198] sm:$0xff] %vm19, 0.0
    %72 = vst.msk [vmem:[#allocation2 + $0x1a0] sm:$0xff] %vm19, 0.0
    %73 = vst.msk [vmem:[#allocation2 + $0x1a8] sm:$0xff] %vm19, 0.0
    %74 = vst.msk [vmem:[#allocation2 + $0x1b0] sm:$0xff] %vm19, 0.0
    %75 = vst.msk [vmem:[#allocation2 + $0x1b8] sm:$0xff] %vm19, 0.0
    %76 = vst.msk [vmem:[#allocation2 + $0x1c0] sm:$0xff] %vm19, 0.0
    %77 = vst.msk [vmem:[#allocation2 + $0x1c8] sm:$0xff] %vm19, 0.0
    %78 = vst.msk [vmem:[#allocation2 + $0x1d0] sm:$0xff] %vm19, 0.0
    %79 = vst.msk [vmem:[#allocation2 + $0x1d8] sm:$0xff] %vm19, 0.0
    %80 = vst.msk [vmem:[#allocation2 + $0x1e0] sm:$0xff] %vm19, 0.0
    %81 = vst.msk [vmem:[#allocation2 + $0x1e8] sm:$0xff] %vm19, 0.0
    %82 = vst.msk [vmem:[#allocation2 + $0x1f0] sm:$0xff] %vm19, 0.0
    %83 = vst.msk [vmem:[#allocation2 + $0x1f8] sm:$0xff] %vm19, 0.0
  $region17: #{tpu_custom_call.1} parent=0 // pred_fallthru
    _
  %v84 = vld [vmem:[#allocation2] sm:$0xff]
  %v85 = vld [vmem:[#allocation2 + $0x8] sm:$0xff]
  %v86 = vld [vmem:[#allocation2 + $0x10] sm:$0xff]
  %v87 = vld [vmem:[#allocation2 + $0x18] sm:$0xff]
  %v88 = vld [vmem:[#allocation2 + $0x20] sm:$0xff]
  %v89 = vld [vmem:[#allocation2 + $0x28] sm:$0xff]
  %v90 = vld [vmem:[#allocation2 + $0x30] sm:$0xff]
  %v91 = vld [vmem:[#allocation2 + $0x38] sm:$0xff]
  %v92 = vld [vmem:[#allocation2 + $0x40] sm:$0xff]
  %v93 = vld [vmem:[#allocation2 + $0x48] sm:$0xff]
  %v94 = vld [vmem:[#allocation2 + $0x50] sm:$0xff]
  %v95 = vld [vmem:[#allocation2 + $0x58] sm:$0xff]
  %v96 = vld [vmem:[#allocation2 + $0x60] sm:$0xff]
  %v97 = vld [vmem:[#allocation2 + $0x68] sm:$0xff]
  %v98 = vld [vmem:[#allocation2 + $0x70] sm:$0xff]
  %v99 = vld [vmem:[#allocation2 + $0x78] sm:$0xff]
  %v100 = vld [vmem:[#allocation2 + $0x80] sm:$0xff]
  %v101 = vld [vmem:[#allocation2 + $0x88] sm:$0xff]
  %v102 = vld [vmem:[#allocation2 + $0x90] sm:$0xff]
  %v103 = vld [vmem:[#allocation2 + $0x98] sm:$0xff]
  %v104 = vld [vmem:[#allocation2 + $0xa0] sm:$0xff]
  %v105 = vld [vmem:[#allocation2 + $0xa8] sm:$0xff]
  %v106 = vld [vmem:[#allocation2 + $0xb0] sm:$0xff]
  %v107 = vld [vmem:[#allocation2 + $0xb8] sm:$0xff]
  %v108 = vld [vmem:[#allocation2 + $0xc0] sm:$0xff]
  %v109 = vld [vmem:[#allocation2 + $0xc8] sm:$0xff]
  %v110 = vld [vmem:[#allocation2 + $0xd0] sm:$0xff]
  %v111 = vld [vmem:[#allocation2 + $0xd8] sm:$0xff]
  %v112 = vld [vmem:[#allocation2 + $0xe0] sm:$0xff]
  %v113 = vld [vmem:[#allocation2 + $0xe8] sm:$0xff]
  %v114 = vld [vmem:[#allocation2 + $0xf0] sm:$0xff]
  %v115 = vld [vmem:[#allocation2 + $0xf8] sm:$0xff]
  %v116 = vld [vmem:[#allocation2 + $0x100] sm:$0xff]
  %v117 = vld [vmem:[#allocation2 + $0x108] sm:$0xff]
  %v118 = vld [vmem:[#allocation2 + $0x110] sm:$0xff]
  %v119 = vld [vmem:[#allocation2 + $0x118] sm:$0xff]
  %v120 = vld [vmem:[#allocation2 + $0x120] sm:$0xff]
  %v121 = vld [vmem:[#allocation2 + $0x128] sm:$0xff]
  %v122 = vld [vmem:[#allocation2 + $0x130] sm:$0xff]
  %v123 = vld [vmem:[#allocation2 + $0x138] sm:$0xff]
  %v124 = vld [vmem:[#allocation2 + $0x140] sm:$0xff]
  %v125 = vld [vmem:[#allocation2 + $0x148] sm:$0xff]
  %v126 = vld [vmem:[#allocation2 + $0x150] sm:$0xff]
  %v127 = vld [vmem:[#allocation2 + $0x158] sm:$0xff]
  %v128 = vld [vmem:[#allocation2 + $0x160] sm:$0xff]
  %v129 = vld [vmem:[#allocation2 + $0x168] sm:$0xff]
  %v130 = vld [vmem:[#allocation2 + $0x170] sm:$0xff]
  %v131 = vld [vmem:[#allocation2 + $0x178] sm:$0xff]
  %v132 = vld [vmem:[#allocation2 + $0x180] sm:$0xff]
  %v133 = vld [vmem:[#allocation2 + $0x188] sm:$0xff]
  %v134 = vld [vmem:[#allocation2 + $0x190] sm:$0xff]
  %v135 = vld [vmem:[#allocation2 + $0x198] sm:$0xff]
  %v136 = vld [vmem:[#allocation2 + $0x1a0] sm:$0xff]
  %v137 = vld [vmem:[#allocation2 + $0x1a8] sm:$0xff]
  %v138 = vld [vmem:[#allocation2 + $0x1b0] sm:$0xff]
  %v139 = vld [vmem:[#allocation2 + $0x1b8] sm:$0xff]
  %v140 = vld [vmem:[#allocation2 + $0x1c0] sm:$0xff]
  %v141 = vld [vmem:[#allocation2 + $0x1c8] sm:$0xff]
  %v142 = vld [vmem:[#allocation2 + $0x1d0] sm:$0xff]
  %v143 = vld [vmem:[#allocation2 + $0x1d8] sm:$0xff]
  %v144 = vld [vmem:[#allocation2 + $0x1e0] sm:$0xff]
  %v145 = vld [vmem:[#allocation2 + $0x1e8] sm:$0xff]
  %v146 = vld [vmem:[#allocation2 + $0x1f0] sm:$0xff]
  %v147 = vld [vmem:[#allocation2 + $0x1f8] sm:$0xff]
  %v148 = vld [vmem:[%s0] sm:$0xf]
  %v149 = vld [vmem:[%s0 + $0x4] sm:$0xf]
  %v150 = vld [vmem:[%s0 + $0x8] sm:$0xf]
  %v151 = vld [vmem:[%s0 + $0xc] sm:$0xf]
  %v152 = vld [vmem:[%s0 + $0x10] sm:$0xf]
  %v153 = vld [vmem:[%s0 + $0x14] sm:$0xf]
  %v154 = vld [vmem:[%s0 + $0x18] sm:$0xf]
  %v155 = vld [vmem:[%s0 + $0x1c] sm:$0xf]
  %v156 = vld [vmem:[%s0 + $0x20] sm:$0xf]
  %v157 = vld [vmem:[%s0 + $0x24] sm:$0xf]
  %v158 = vld [vmem:[%s0 + $0x28] sm:$0xf]
  %v159 = vld [vmem:[%s0 + $0x2c] sm:$0xf]
  %v160 = vld [vmem:[%s0 + $0x30] sm:$0xf]
  %v161 = vld [vmem:[%s0 + $0x34] sm:$0xf]
  %v162 = vld [vmem:[%s0 + $0x38] sm:$0xf]
  %v163 = vld [vmem:[%s0 + $0x3c] sm:$0xf]
  %v164 = vld [vmem:[%s0 + $0x40] sm:$0xf]
  %v165 = vld [vmem:[%s0 + $0x44] sm:$0xf]
  %v166 = vld [vmem:[%s0 + $0x48] sm:$0xf]
  %v167 = vld [vmem:[%s0 + $0x4c] sm:$0xf]
  %v168 = vld [vmem:[%s0 + $0x50] sm:$0xf]
  %v169 = vld [vmem:[%s0 + $0x54] sm:$0xf]
  %v170 = vld [vmem:[%s0 + $0x58] sm:$0xf]
  %v171 = vld [vmem:[%s0 + $0x5c] sm:$0xf]
  %v172 = vld [vmem:[%s0 + $0x60] sm:$0xf]
  %v173 = vld [vmem:[%s0 + $0x64] sm:$0xf]
  %v174 = vld [vmem:[%s0 + $0x68] sm:$0xf]
  %v175 = vld [vmem:[%s0 + $0x6c] sm:$0xf]
  %v176 = vld [vmem:[%s0 + $0x70] sm:$0xf]
  %v177 = vld [vmem:[%s0 + $0x74] sm:$0xf]
  %v178 = vld [vmem:[%s0 + $0x78] sm:$0xf]
  %v179 = vld [vmem:[%s0 + $0x7c] sm:$0xf]
  %v180 = vld [vmem:[%s0 + $0x80] sm:$0xf]
  %v181 = vld [vmem:[%s0 + $0x84] sm:$0xf]
  %v182 = vld [vmem:[%s0 + $0x88] sm:$0xf]
  %v183 = vld [vmem:[%s0 + $0x8c] sm:$0xf]
  %v184 = vld [vmem:[%s0 + $0x90] sm:$0xf]
  %v185 = vld [vmem:[%s0 + $0x94] sm:$0xf]
  %v186 = vld [vmem:[%s0 + $0x98] sm:$0xf]
  %v187 = vld [vmem:[%s0 + $0x9c] sm:$0xf]
  %v188 = vld [vmem:[%s0 + $0xa0] sm:$0xf]
  %v189 = vld [vmem:[%s0 + $0xa4] sm:$0xf]
  %v190 = vld [vmem:[%s0 + $0xa8] sm:$0xf]
  %v191 = vld [vmem:[%s0 + $0xac] sm:$0xf]
  %v192 = vld [vmem:[%s0 + $0xb0] sm:$0xf]
  %v193 = vld [vmem:[%s0 + $0xb4] sm:$0xf]
  %v194 = vld [vmem:[%s0 + $0xb8] sm:$0xf]
  %v195 = vld [vmem:[%s0 + $0xbc] sm:$0xf]
  %v196 = vld [vmem:[%s0 + $0xc0] sm:$0xf]
  %v197 = vld [vmem:[%s0 + $0xc4] sm:$0xf]
  %v198 = vld [vmem:[%s0 + $0xc8] sm:$0xf]
  %v199 = vld [vmem:[%s0 + $0xcc] sm:$0xf]
  %v200 = vld [vmem:[%s0 + $0xd0] sm:$0xf]
  %v201 = vld [vmem:[%s0 + $0xd4] sm:$0xf]
  %v202 = vld [vmem:[%s0 + $0xd8] sm:$0xf]
  %v203 = vld [vmem:[%s0 + $0xdc] sm:$0xf]
  %v204 = vld [vmem:[%s0 + $0xe0] sm:$0xf]
  %v205 = vld [vmem:[%s0 + $0xe4] sm:$0xf]
  %v206 = vld [vmem:[%s0 + $0xe8] sm:$0xf]
  %v207 = vld [vmem:[%s0 + $0xec] sm:$0xf]
  %v208 = vld [vmem:[%s0 + $0xf0] sm:$0xf]
  %v209 = vld [vmem:[%s0 + $0xf4] sm:$0xf]
  %v210 = vld [vmem:[%s0 + $0xf8] sm:$0xf]
  %v211 = vld [vmem:[%s0 + $0xfc] sm:$0xf]
  %v212 = vld [vmem:[%s1] sm:$0xf]
  %v213 = vld [vmem:[%s1 + $0x4] sm:$0xf]
  %v214 = vld [vmem:[%s1 + $0x8] sm:$0xf]
  %v215 = vld [vmem:[%s1 + $0xc] sm:$0xf]
  %v216 = vld [vmem:[%s1 + $0x10] sm:$0xf]
  %v217 = vld [vmem:[%s1 + $0x14] sm:$0xf]
  %v218 = vld [vmem:[%s1 + $0x18] sm:$0xf]
  %v219 = vld [vmem:[%s1 + $0x1c] sm:$0xf]
  %v284 = vunpack.c.l.b16 %v148
  %v285 = vunpack.c.l.b16 %v149
  %v286 = vunpack.c.l.b16 %v150
  %v287 = vunpack.c.l.b16 %v151
  %v288 = vunpack.c.l.b16 %v152
  %v289 = vunpack.c.l.b16 %v153
  %v290 = vunpack.c.l.b16 %v154
  %v291 = vunpack.c.l.b16 %v155
  %v292 = vunpack.c.l.b16 %v156
  %v293 = vunpack.c.l.b16 %v157
  %v294 = vunpack.c.l.b16 %v158
  %v295 = vunpack.c.l.b16 %v159
  %v296 = vunpack.c.l.b16 %v160
  %v297 = vunpack.c.l.b16 %v161
  %v298 = vunpack.c.l.b16 %v162
  %v299 = vunpack.c.l.b16 %v163
  %v300 = vunpack.c.l.b16 %v164
  %v301 = vunpack.c.l.b16 %v165
  %v302 = vunpack.c.l.b16 %v166
  %v303 = vunpack.c.l.b16 %v167
  %v304 = vunpack.c.l.b16 %v168
  %v305 = vunpack.c.l.b16 %v169
  %v306 = vunpack.c.l.b16 %v170
  %v307 = vunpack.c.l.b16 %v171
  %v308 = vunpack.c.l.b16 %v172
  %v309 = vunpack.c.l.b16 %v173
  %v310 = vunpack.c.l.b16 %v174
  %v311 = vunpack.c.l.b16 %v175
  %v312 = vunpack.c.l.b16 %v176
  %v313 = vunpack.c.l.b16 %v177
  %v314 = vunpack.c.l.b16 %v178
  %v315 = vunpack.c.l.b16 %v179
  %v316 = vunpack.c.l.b16 %v180
  %v317 = vunpack.c.l.b16 %v181
  %v318 = vunpack.c.l.b16 %v182
  %v319 = vunpack.c.l.b16 %v183
  %v320 = vunpack.c.l.b16 %v184
  %v321 = vunpack.c.l.b16 %v185
  %v322 = vunpack.c.l.b16 %v186
  %v323 = vunpack.c.l.b16 %v187
  %v324 = vunpack.c.l.b16 %v188
  %v325 = vunpack.c.l.b16 %v189
  %v326 = vunpack.c.l.b16 %v190
  %v327 = vunpack.c.l.b16 %v191
  %v328 = vunpack.c.l.b16 %v192
  %v329 = vunpack.c.l.b16 %v193
  %v330 = vunpack.c.l.b16 %v194
  %v331 = vunpack.c.l.b16 %v195
  %v332 = vunpack.c.l.b16 %v196
  %v333 = vunpack.c.l.b16 %v197
  %v334 = vunpack.c.l.b16 %v198
  %v335 = vunpack.c.l.b16 %v199
  %v336 = vunpack.c.l.b16 %v200
  %v337 = vunpack.c.l.b16 %v201
  %v338 = vunpack.c.l.b16 %v202
  %v339 = vunpack.c.l.b16 %v203
  %v340 = vunpack.c.l.b16 %v204
  %v341 = vunpack.c.l.b16 %v205
  %v342 = vunpack.c.l.b16 %v206
  %v343 = vunpack.c.l.b16 %v207
  %v344 = vunpack.c.l.b16 %v208
  %v345 = vunpack.c.l.b16 %v209
  %v346 = vunpack.c.l.b16 %v210
  %v347 = vunpack.c.l.b16 %v211
  %v348 = vpack.c.b16 %v285, %v284
  %v349 = vpack.c.b16 %v287, %v286
  %v350 = vpack.c.b16 %v289, %v288
  %v351 = vpack.c.b16 %v291, %v290
  %v352 = vpack.c.b16 %v293, %v292
  %v353 = vpack.c.b16 %v295, %v294
  %v354 = vpack.c.b16 %v297, %v296
  %v355 = vpack.c.b16 %v299, %v298
  %v356 = vpack.c.b16 %v301, %v300
  %v357 = vpack.c.b16 %v303, %v302
  %v358 = vpack.c.b16 %v305, %v304
  %v359 = vpack.c.b16 %v307, %v306
  %v360 = vpack.c.b16 %v309, %v308
  %v361 = vpack.c.b16 %v311, %v310
  %v362 = vpack.c.b16 %v313, %v312
  %v363 = vpack.c.b16 %v315, %v314
  %v364 = vpack.c.b16 %v317, %v316
  %v365 = vpack.c.b16 %v319, %v318
  %v366 = vpack.c.b16 %v321, %v320
  %v367 = vpack.c.b16 %v323, %v322
  %v368 = vpack.c.b16 %v325, %v324
  %v369 = vpack.c.b16 %v327, %v326
  %v370 = vpack.c.b16 %v329, %v328
  %v371 = vpack.c.b16 %v331, %v330
  %v372 = vpack.c.b16 %v333, %v332
  %v373 = vpack.c.b16 %v335, %v334
  %v374 = vpack.c.b16 %v337, %v336
  %v375 = vpack.c.b16 %v339, %v338
  %v376 = vpack.c.b16 %v341, %v340
  %v377 = vpack.c.b16 %v343, %v342
  %v378 = vpack.c.b16 %v345, %v344
  %v379 = vpack.c.b16 %v347, %v346
  %v388 = vunpack.c.l.b16 %v212
  %v389 = vunpack.c.l.b16 %v213
  %v390 = vunpack.c.l.b16 %v214
  %v391 = vunpack.c.l.b16 %v215
  %v392 = vunpack.c.l.b16 %v216
  %v393 = vunpack.c.l.b16 %v217
  %v394 = vunpack.c.l.b16 %v218
  %v395 = vunpack.c.l.b16 %v219
  %v396 = vpack.c.b16 %v389, %v388
  %v397 = vpack.c.b16 %v391, %v390
  %v398 = vpack.c.b16 %v393, %v392
  %v399 = vpack.c.b16 %v395, %v394
  %vm404 = vcmask 523264
  %v406 = vsel %vm404, %v348, 0
  %v409 = vsel %vm404, %v349, 0
  %v412 = vsel %vm404, %v350, 0
  %v415 = vsel %vm404, %v351, 0
  %v418 = vsel %vm404, %v352, 0
  %v421 = vsel %vm404, %v353, 0
  %v424 = vsel %vm404, %v354, 0
  %v427 = vsel %vm404, %v355, 0
  %v430 = vsel %vm404, %v356, 0
  %v433 = vsel %vm404, %v357, 0
  %v436 = vsel %vm404, %v358, 0
  %v439 = vsel %vm404, %v359, 0
  %v442 = vsel %vm404, %v360, 0
  %v445 = vsel %vm404, %v361, 0
  %v448 = vsel %vm404, %v362, 0
  %v451 = vsel %vm404, %v363, 0
  %v454 = vsel %vm404, %v364, 0
  %v457 = vsel %vm404, %v365, 0
  %v460 = vsel %vm404, %v366, 0
  %v463 = vsel %vm404, %v367, 0
  %v466 = vsel %vm404, %v368, 0
  %v469 = vsel %vm404, %v369, 0
  %v472 = vsel %vm404, %v370, 0
  %v475 = vsel %vm404, %v371, 0
  %v478 = vsel %vm404, %v372, 0
  %v481 = vsel %vm404, %v373, 0
  %v484 = vsel %vm404, %v374, 0
  %v487 = vsel %vm404, %v375, 0
  %v490 = vsel %vm404, %v376, 0
  %v493 = vsel %vm404, %v377, 0
  %v496 = vsel %vm404, %v378, 0
  %v499 = vsel %vm404, %v379, 0
  %501 = vmatpush.bf16.msra.mxu0 0
  %502 = vmatpush.bf16.msra.mxu0 0
  %503 = vmatpush.bf16.msra.mxu0 0
  %504 = vmatpush.bf16.msra.mxu0 0
  %505 = vmatpush.bf16.msra.mxu0 %v399
  %506 = vmatpush.bf16.msra.mxu0 %v398
  %507 = vmatpush.bf16.msra.mxu0 %v397
  %508 = vmatpush.bf16.msra.mxu0 %v396
  %509 = vmatmul.bf16.gmra.mxu0 %v406
  %v510 = vpop.f32.mrf.mxu0
  %v511 = vadd.f32 0.0, %v510
  %v512 = vpop.f32.mrf.mxu0
  %v513 = vadd.f32 0.0, %v512
  %514 = vmatmul.bf16.gmra.mxu0 %v409
  %v515 = vpop.f32.mrf.mxu0
  %v516 = vadd.f32 0.0, %v515
  %v517 = vpop.f32.mrf.mxu0
  %v518 = vadd.f32 0.0, %v517
  %519 = vmatmul.bf16.gmra.mxu0 %v412
  %v520 = vpop.f32.mrf.mxu0
  %v521 = vadd.f32 0.0, %v520
  %v522 = vpop.f32.mrf.mxu0
  %v523 = vadd.f32 0.0, %v522
  %524 = vmatmul.bf16.gmra.mxu0 %v415
  %v525 = vpop.f32.mrf.mxu0
  %v526 = vadd.f32 0.0, %v525
  %v527 = vpop.f32.mrf.mxu0
  %v528 = vadd.f32 0.0, %v527
  %529 = vmatmul.bf16.gmra.mxu0 %v418
  %v530 = vpop.f32.mrf.mxu0
  %v531 = vadd.f32 0.0, %v530
  %v532 = vpop.f32.mrf.mxu0
  %v533 = vadd.f32 0.0, %v532
  %534 = vmatmul.bf16.gmra.mxu0 %v421
  %v535 = vpop.f32.mrf.mxu0
  %v536 = vadd.f32 0.0, %v535
  %v537 = vpop.f32.mrf.mxu0
  %v538 = vadd.f32 0.0, %v537
  %539 = vmatmul.bf16.gmra.mxu0 %v424
  %v540 = vpop.f32.mrf.mxu0
  %v541 = vadd.f32 0.0, %v540
  %v542 = vpop.f32.mrf.mxu0
  %v543 = vadd.f32 0.0, %v542
  %544 = vmatmul.bf16.gmra.mxu0 %v427
  %v545 = vpop.f32.mrf.mxu0
  %v546 = vadd.f32 0.0, %v545
  %v547 = vpop.f32.mrf.mxu0
  %v548 = vadd.f32 0.0, %v547
  %549 = vmatmul.bf16.gmra.mxu0 %v430
  %v550 = vpop.f32.mrf.mxu0
  %v551 = vadd.f32 0.0, %v550
  %v552 = vpop.f32.mrf.mxu0
  %v553 = vadd.f32 0.0, %v552
  %554 = vmatmul.bf16.gmra.mxu0 %v433
  %v555 = vpop.f32.mrf.mxu0
  %v556 = vadd.f32 0.0, %v555
  %v557 = vpop.f32.mrf.mxu0
  %v558 = vadd.f32 0.0, %v557
  %559 = vmatmul.bf16.gmra.mxu0 %v436
  %v560 = vpop.f32.mrf.mxu0
  %v561 = vadd.f32 0.0, %v560
  %v562 = vpop.f32.mrf.mxu0
  %v563 = vadd.f32 0.0, %v562
  %564 = vmatmul.bf16.gmra.mxu0 %v439
  %v565 = vpop.f32.mrf.mxu0
  %v566 = vadd.f32 0.0, %v565
  %v567 = vpop.f32.mrf.mxu0
  %v568 = vadd.f32 0.0, %v567
  %569 = vmatmul.bf16.gmra.mxu0 %v442
  %v570 = vpop.f32.mrf.mxu0
  %v571 = vadd.f32 0.0, %v570
  %v572 = vpop.f32.mrf.mxu0
  %v573 = vadd.f32 0.0, %v572
  %574 = vmatmul.bf16.gmra.mxu0 %v445
  %v575 = vpop.f32.mrf.mxu0
  %v576 = vadd.f32 0.0, %v575
  %v577 = vpop.f32.mrf.mxu0
  %v578 = vadd.f32 0.0, %v577
  %579 = vmatmul.bf16.gmra.mxu0 %v448
  %v580 = vpop.f32.mrf.mxu0
  %v581 = vadd.f32 0.0, %v580
  %v582 = vpop.f32.mrf.mxu0
  %v583 = vadd.f32 0.0, %v582
  %584 = vmatmul.bf16.gmra.mxu0 %v451
  %v585 = vpop.f32.mrf.mxu0
  %v586 = vadd.f32 0.0, %v585
  %v587 = vpop.f32.mrf.mxu0
  %v588 = vadd.f32 0.0, %v587
  %589 = vmatmul.bf16.gmra.mxu0 %v454
  %v590 = vpop.f32.mrf.mxu0
  %v591 = vadd.f32 0.0, %v590
  %v592 = vpop.f32.mrf.mxu0
  %v593 = vadd.f32 0.0, %v592
  %594 = vmatmul.bf16.gmra.mxu0 %v457
  %v595 = vpop.f32.mrf.mxu0
  %v596 = vadd.f32 0.0, %v595
  %v597 = vpop.f32.mrf.mxu0
  %v598 = vadd.f32 0.0, %v597
  %599 = vmatmul.bf16.gmra.mxu0 %v460
  %v600 = vpop.f32.mrf.mxu0
  %v601 = vadd.f32 0.0, %v600
  %v602 = vpop.f32.mrf.mxu0
  %v603 = vadd.f32 0.0, %v602
  %604 = vmatmul.bf16.gmra.mxu0 %v463
  %v605 = vpop.f32.mrf.mxu0
  %v606 = vadd.f32 0.0, %v605
  %v607 = vpop.f32.mrf.mxu0
  %v608 = vadd.f32 0.0, %v607
  %609 = vmatmul.bf16.gmra.mxu0 %v466
  %v610 = vpop.f32.mrf.mxu0
  %v611 = vadd.f32 0.0, %v610
  %v612 = vpop.f32.mrf.mxu0
  %v613 = vadd.f32 0.0, %v612
  %614 = vmatmul.bf16.gmra.mxu0 %v469
  %v615 = vpop.f32.mrf.mxu0
  %v616 = vadd.f32 0.0, %v615
  %v617 = vpop.f32.mrf.mxu0
  %v618 = vadd.f32 0.0, %v617
  %619 = vmatmul.bf16.gmra.mxu0 %v472
  %v620 = vpop.f32.mrf.mxu0
  %v621 = vadd.f32 0.0, %v620
  %v622 = vpop.f32.mrf.mxu0
  %v623 = vadd.f32 0.0, %v622
  %624 = vmatmul.bf16.gmra.mxu0 %v475
  %v625 = vpop.f32.mrf.mxu0
  %v626 = vadd.f32 0.0, %v625
  %v627 = vpop.f32.mrf.mxu0
  %v628 = vadd.f32 0.0, %v627
  %629 = vmatmul.bf16.gmra.mxu0 %v478
  %v630 = vpop.f32.mrf.mxu0
  %v631 = vadd.f32 0.0, %v630
  %v632 = vpop.f32.mrf.mxu0
  %v633 = vadd.f32 0.0, %v632
  %634 = vmatmul.bf16.gmra.mxu0 %v481
  %v635 = vpop.f32.mrf.mxu0
  %v636 = vadd.f32 0.0, %v635
  %v637 = vpop.f32.mrf.mxu0
  %v638 = vadd.f32 0.0, %v637
  %639 = vmatmul.bf16.gmra.mxu0 %v484
  %v640 = vpop.f32.mrf.mxu0
  %v641 = vadd.f32 0.0, %v640
  %v642 = vpop.f32.mrf.mxu0
  %v643 = vadd.f32 0.0, %v642
  %644 = vmatmul.bf16.gmra.mxu0 %v487
  %v645 = vpop.f32.mrf.mxu0
  %v646 = vadd.f32 0.0, %v645
  %v647 = vpop.f32.mrf.mxu0
  %v648 = vadd.f32 0.0, %v647
  %649 = vmatmul.bf16.gmra.mxu0 %v490
  %v650 = vpop.f32.mrf.mxu0
  %v651 = vadd.f32 0.0, %v650
  %v652 = vpop.f32.mrf.mxu0
  %v653 = vadd.f32 0.0, %v652
  %654 = vmatmul.bf16.gmra.mxu0 %v493
  %v655 = vpop.f32.mrf.mxu0
  %v656 = vadd.f32 0.0, %v655
  %v657 = vpop.f32.mrf.mxu0
  %v658 = vadd.f32 0.0, %v657
  %659 = vmatmul.bf16.gmra.mxu0 %v496
  %v660 = vpop.f32.mrf.mxu0
  %v661 = vadd.f32 0.0, %v660
  %v662 = vpop.f32.mrf.mxu0
  %v663 = vadd.f32 0.0, %v662
  %664 = vmatmul.bf16.gmra.mxu0 %v499
  %v665 = vpop.f32.mrf.mxu0
  %v666 = vadd.f32 0.0, %v665
  %v667 = vpop.f32.mrf.mxu0
  %v668 = vadd.f32 0.0, %v667
  %669 = vdwg.mxu0
  %v670 = vadd.f32 %v84, %v511
  %v671 = vadd.f32 %v85, %v513
  %v672 = vadd.f32 %v86, %v516
  %v673 = vadd.f32 %v87, %v518
  %v674 = vadd.f32 %v88, %v521
  %v675 = vadd.f32 %v89, %v523
  %v676 = vadd.f32 %v90, %v526
  %v677 = vadd.f32 %v91, %v528
  %v678 = vadd.f32 %v92, %v531
  %v679 = vadd.f32 %v93, %v533
  %v680 = vadd.f32 %v94, %v536
  %v681 = vadd.f32 %v95, %v538
  %v682 = vadd.f32 %v96, %v541
  %v683 = vadd.f32 %v97, %v543
  %v684 = vadd.f32 %v98, %v546
  %v685 = vadd.f32 %v99, %v548
  %v686 = vadd.f32 %v100, %v551
  %v687 = vadd.f32 %v101, %v553
  %v688 = vadd.f32 %v102, %v556
  %v689 = vadd.f32 %v103, %v558
  %v690 = vadd.f32 %v104, %v561
  %v691 = vadd.f32 %v105, %v563
  %v692 = vadd.f32 %v106, %v566
  %v693 = vadd.f32 %v107, %v568
  %v694 = vadd.f32 %v108, %v571
  %v695 = vadd.f32 %v109, %v573
  %v696 = vadd.f32 %v110, %v576
  %v697 = vadd.f32 %v111, %v578
  %v698 = vadd.f32 %v112, %v581
  %v699 = vadd.f32 %v113, %v583
  %v700 = vadd.f32 %v114, %v586
  %v701 = vadd.f32 %v115, %v588
  %v702 = vadd.f32 %v116, %v591
  %v703 = vadd.f32 %v117, %v593
  %v704 = vadd.f32 %v118, %v596
  %v705 = vadd.f32 %v119, %v598
  %v706 = vadd.f32 %v120, %v601
  %v707 = vadd.f32 %v121, %v603
  %v708 = vadd.f32 %v122, %v606
  %v709 = vadd.f32 %v123, %v608
  %v710 = vadd.f32 %v124, %v611
  %v711 = vadd.f32 %v125, %v613
  %v712 = vadd.f32 %v126, %v616
  %v713 = vadd.f32 %v127, %v618
  %v714 = vadd.f32 %v128, %v621
  %v715 = vadd.f32 %v129, %v623
  %v716 = vadd.f32 %v130, %v626
  %v717 = vadd.f32 %v131, %v628
  %v718 = vadd.f32 %v132, %v631
  %v719 = vadd.f32 %v133, %v633
  %v720 = vadd.f32 %v134, %v636
  %v721 = vadd.f32 %v135, %v638
  %v722 = vadd.f32 %v136, %v641
  %v723 = vadd.f32 %v137, %v643
  %v724 = vadd.f32 %v138, %v646
  %v725 = vadd.f32 %v139, %v648
  %v726 = vadd.f32 %v140, %v651
  %v727 = vadd.f32 %v141, %v653
  %v728 = vadd.f32 %v142, %v656
  %v729 = vadd.f32 %v143, %v658
  %v730 = vadd.f32 %v144, %v661
  %v731 = vadd.f32 %v145, %v663
  %v732 = vadd.f32 %v146, %v666
  %v733 = vadd.f32 %v147, %v668
  %vm734 = vcmask 130048
  %735 = vst.msk [vmem:[#allocation2] sm:$0xff] %vm734, %v670
  %736 = vst.msk [vmem:[#allocation2 + $0x8] sm:$0xff] %vm734, %v671
  %737 = vst.msk [vmem:[#allocation2 + $0x10] sm:$0xff] %vm734, %v672
  %738 = vst.msk [vmem:[#allocation2 + $0x18] sm:$0xff] %vm734, %v673
  %739 = vst.msk [vmem:[#allocation2 + $0x20] sm:$0xff] %vm734, %v674
  %740 = vst.msk [vmem:[#allocation2 + $0x28] sm:$0xff] %vm734, %v675
  %741 = vst.msk [vmem:[#allocation2 + $0x30] sm:$0xff] %vm734, %v676
  %742 = vst.msk [vmem:[#allocation2 + $0x38] sm:$0xff] %vm734, %v677
  %743 = vst.msk [vmem:[#allocation2 + $0x40] sm:$0xff] %vm734, %v678
  %744 = vst.msk [vmem:[#allocation2 + $0x48] sm:$0xff] %vm734, %v679
  %745 = vst.msk [vmem:[#allocation2 + $0x50] sm:$0xff] %vm734, %v680
  %746 = vst.msk [vmem:[#allocation2 + $0x58] sm:$0xff] %vm734, %v681
  %747 = vst.msk [vmem:[#allocation2 + $0x60] sm:$0xff] %vm734, %v682
  %748 = vst.msk [vmem:[#allocation2 + $0x68] sm:$0xff] %vm734, %v683
  %749 = vst.msk [vmem:[#allocation2 + $0x70] sm:$0xff] %vm734, %v684
  %750 = vst.msk [vmem:[#allocation2 + $0x78] sm:$0xff] %vm734, %v685
  %751 = vst.msk [vmem:[#allocation2 + $0x80] sm:$0xff] %vm734, %v686
  %752 = vst.msk [vmem:[#allocation2 + $0x88] sm:$0xff] %vm734, %v687
  %753 = vst.msk [vmem:[#allocation2 + $0x90] sm:$0xff] %vm734, %v688
  %754 = vst.msk [vmem:[#allocation2 + $0x98] sm:$0xff] %vm734, %v689
  %755 = vst.msk [vmem:[#allocation2 + $0xa0] sm:$0xff] %vm734, %v690
  %756 = vst.msk [vmem:[#allocation2 + $0xa8] sm:$0xff] %vm734, %v691
  %757 = vst.msk [vmem:[#allocation2 + $0xb0] sm:$0xff] %vm734, %v692
  %758 = vst.msk [vmem:[#allocation2 + $0xb8] sm:$0xff] %vm734, %v693
  %759 = vst.msk [vmem:[#allocation2 + $0xc0] sm:$0xff] %vm734, %v694
  %760 = vst.msk [vmem:[#allocation2 + $0xc8] sm:$0xff] %vm734, %v695
  %761 = vst.msk [vmem:[#allocation2 + $0xd0] sm:$0xff] %vm734, %v696
  %762 = vst.msk [vmem:[#allocation2 + $0xd8] sm:$0xff] %vm734, %v697
  %763 = vst.msk [vmem:[#allocation2 + $0xe0] sm:$0xff] %vm734, %v698
  %764 = vst.msk [vmem:[#allocation2 + $0xe8] sm:$0xff] %vm734, %v699
  %765 = vst.msk [vmem:[#allocation2 + $0xf0] sm:$0xff] %vm734, %v700
  %766 = vst.msk [vmem:[#allocation2 + $0xf8] sm:$0xff] %vm734, %v701
  %767 = vst.msk [vmem:[#allocation2 + $0x100] sm:$0xff] %vm734, %v702
  %768 = vst.msk [vmem:[#allocation2 + $0x108] sm:$0xff] %vm734, %v703
  %769 = vst.msk [vmem:[#allocation2 + $0x110] sm:$0xff] %vm734, %v704
  %770 = vst.msk [vmem:[#allocation2 + $0x118] sm:$0xff] %vm734, %v705
  %771 = vst.msk [vmem:[#allocation2 + $0x120] sm:$0xff] %vm734, %v706
  %772 = vst.msk [vmem:[#allocation2 + $0x128] sm:$0xff] %vm734, %v707
  %773 = vst.msk [vmem:[#allocation2 + $0x130] sm:$0xff] %vm734, %v708
  %774 = vst.msk [vmem:[#allocation2 + $0x138] sm:$0xff] %vm734, %v709
  %775 = vst.msk [vmem:[#allocation2 + $0x140] sm:$0xff] %vm734, %v710
  %776 = vst.msk [vmem:[#allocation2 + $0x148] sm:$0xff] %vm734, %v711
  %777 = vst.msk [vmem:[#allocation2 + $0x150] sm:$0xff] %vm734, %v712
  %778 = vst.msk [vmem:[#allocation2 + $0x158] sm:$0xff] %vm734, %v713
  %779 = vst.msk [vmem:[#allocation2 + $0x160] sm:$0xff] %vm734, %v714
  %780 = vst.msk [vmem:[#allocation2 + $0x168] sm:$0xff] %vm734, %v715
  %781 = vst.msk [vmem:[#allocation2 + $0x170] sm:$0xff] %vm734, %v716
  %782 = vst.msk [vmem:[#allocation2 + $0x178] sm:$0xff] %vm734, %v717
  %783 = vst.msk [vmem:[#allocation2 + $0x180] sm:$0xff] %vm734, %v718
  %784 = vst.msk [vmem:[#allocation2 + $0x188] sm:$0xff] %vm734, %v719
  %785 = vst.msk [vmem:[#allocation2 + $0x190] sm:$0xff] %vm734, %v720
  %786 = vst.msk [vmem:[#allocation2 + $0x198] sm:$0xff] %vm734, %v721
  %787 = vst.msk [vmem:[#allocation2 + $0x1a0] sm:$0xff] %vm734, %v722
  %788 = vst.msk [vmem:[#allocation2 + $0x1a8] sm:$0xff] %vm734, %v723
  %789 = vst.msk [vmem:[#allocation2 + $0x1b0] sm:$0xff] %vm734, %v724
  %790 = vst.msk [vmem:[#allocation2 + $0x1b8] sm:$0xff] %vm734, %v725
  %791 = vst.msk [vmem:[#allocation2 + $0x1c0] sm:$0xff] %vm734, %v726
  %792 = vst.msk [vmem:[#allocation2 + $0x1c8] sm:$0xff] %vm734, %v727
  %793 = vst.msk [vmem:[#allocation2 + $0x1d0] sm:$0xff] %vm734, %v728
  %794 = vst.msk [vmem:[#allocation2 + $0x1d8] sm:$0xff] %vm734, %v729
  %795 = vst.msk [vmem:[#allocation2 + $0x1e0] sm:$0xff] %vm734, %v730
  %796 = vst.msk [vmem:[#allocation2 + $0x1e8] sm:$0xff] %vm734, %v731
  %797 = vst.msk [vmem:[#allocation2 + $0x1f0] sm:$0xff] %vm734, %v732
  %798 = vst.msk [vmem:[#allocation2 + $0x1f8] sm:$0xff] %vm734, %v733
  // Predicated region
  $region18: #{tpu_custom_call.1} parent=0 // pred_check
    %p799 = pneg %p15
  $region19: #{tpu_custom_call.1} parent=0 // pred_check_branch
    %801 = sbr.rel (%p799) target = $region21
  $region20: #{tpu_custom_call.1} parent=0 // pred_region
    %v802 = vld [vmem:[#allocation2] sm:$0xff]
    %v803 = vld [vmem:[#allocation2 + $0x8] sm:$0xff]
    %v804 = vld [vmem:[#allocation2 + $0x10] sm:$0xff]
    %v805 = vld [vmem:[#allocation2 + $0x18] sm:$0xff]
    %v806 = vld [vmem:[#allocation2 + $0x20] sm:$0xff]
    %v807 = vld [vmem:[#allocation2 + $0x28] sm:$0xff]
    %v808 = vld [vmem:[#allocation2 + $0x30] sm:$0xff]
    %v809 = vld [vmem:[#allocation2 + $0x38] sm:$0xff]
    %v810 = vld [vmem:[#allocation2 + $0x40] sm:$0xff]
    %v811 = vld [vmem:[#allocation2 + $0x48] sm:$0xff]
    %v812 = vld [vmem:[#allocation2 + $0x50] sm:$0xff]
    %v813 = vld [vmem:[#allocation2 + $0x58] sm:$0xff]
    %v814 = vld [vmem:[#allocation2 + $0x60] sm:$0xff]
    %v815 = vld [vmem:[#allocation2 + $0x68] sm:$0xff]
    %v816 = vld [vmem:[#allocation2 + $0x70] sm:$0xff]
    %v817 = vld [vmem:[#allocation2 + $0x78] sm:$0xff]
    %v818 = vld [vmem:[#allocation2 + $0x80] sm:$0xff]
    %v819 = vld [vmem:[#allocation2 + $0x88] sm:$0xff]
    %v820 = vld [vmem:[#allocation2 + $0x90] sm:$0xff]
    %v821 = vld [vmem:[#allocation2 + $0x98] sm:$0xff]
    %v822 = vld [vmem:[#allocation2 + $0xa0] sm:$0xff]
    %v823 = vld [vmem:[#allocation2 + $0xa8] sm:$0xff]
    %v824 = vld [vmem:[#allocation2 + $0xb0] sm:$0xff]
    %v825 = vld [vmem:[#allocation2 + $0xb8] sm:$0xff]
    %v826 = vld [vmem:[#allocation2 + $0xc0] sm:$0xff]
    %v827 = vld [vmem:[#allocation2 + $0xc8] sm:$0xff]
    %v828 = vld [vmem:[#allocation2 + $0xd0] sm:$0xff]
    %v829 = vld [vmem:[#allocation2 + $0xd8] sm:$0xff]
    %v830 = vld [vmem:[#allocation2 + $0xe0] sm:$0xff]
    %v831 = vld [vmem:[#allocation2 + $0xe8] sm:$0xff]
    %v832 = vld [vmem:[#allocation2 + $0xf0] sm:$0xff]
    %v833 = vld [vmem:[#allocation2 + $0xf8] sm:$0xff]
    %v834 = vld [vmem:[#allocation2 + $0x100] sm:$0xff]
    %v835 = vld [vmem:[#allocation2 + $0x108] sm:$0xff]
    %v836 = vld [vmem:[#allocation2 + $0x110] sm:$0xff]
    %v837 = vld [vmem:[#allocation2 + $0x118] sm:$0xff]
    %v838 = vld [vmem:[#allocation2 + $0x120] sm:$0xff]
    %v839 = vld [vmem:[#allocation2 + $0x128] sm:$0xff]
    %v840 = vld [vmem:[#allocation2 + $0x130] sm:$0xff]
    %v841 = vld [vmem:[#allocation2 + $0x138] sm:$0xff]
    %v842 = vld [vmem:[#allocation2 + $0x140] sm:$0xff]
    %v843 = vld [vmem:[#allocation2 + $0x148] sm:$0xff]
    %v844 = vld [vmem:[#allocation2 + $0x150] sm:$0xff]
    %v845 = vld [vmem:[#allocation2 + $0x158] sm:$0xff]
    %v846 = vld [vmem:[#allocation2 + $0x160] sm:$0xff]
    %v847 = vld [vmem:[#allocation2 + $0x168] sm:$0xff]
    %v848 = vld [vmem:[#allocation2 + $0x170] sm:$0xff]
    %v849 = vld [vmem:[#allocation2 + $0x178] sm:$0xff]
    %v850 = vld [vmem:[#allocation2 + $0x180] sm:$0xff]
    %v851 = vld [vmem:[#allocation2 + $0x188] sm:$0xff]
    %v852 = vld [vmem:[#allocation2 + $0x190] sm:$0xff]
    %v853 = vld [vmem:[#allocation2 + $0x198] sm:$0xff]
    %v854 = vld [vmem:[#allocation2 + $0x1a0] sm:$0xff]
    %v855 = vld [vmem:[#allocation2 + $0x1a8] sm:$0xff]
    %v856 = vld [vmem:[#allocation2 + $0x1b0] sm:$0xff]
    %v857 = vld [vmem:[#allocation2 + $0x1b8] sm:$0xff]
    %v858 = vld [vmem:[#allocation2 + $0x1c0] sm:$0xff]
    %v859 = vld [vmem:[#allocation2 + $0x1c8] sm:$0xff]
    %v860 = vld [vmem:[#allocation2 + $0x1d0] sm:$0xff]
    %v861 = vld [vmem:[#allocation2 + $0x1d8] sm:$0xff]
    %v862 = vld [vmem:[#allocation2 + $0x1e0] sm:$0xff]
    %v863 = vld [vmem:[#allocation2 + $0x1e8] sm:$0xff]
    %v864 = vld [vmem:[#allocation2 + $0x1f0] sm:$0xff]
    %v865 = vld [vmem:[#allocation2 + $0x1f8] sm:$0xff]
    %v866 = vld [vmem:[%s2] sm:$0x1]
    %v868 = vperm.slane %v866, 0
    %v870 = vadd.f32 %v802, %v868
    %v871 = vadd.f32 %v803, %v868
    %v872 = vadd.f32 %v804, %v868
    %v873 = vadd.f32 %v805, %v868
    %v874 = vadd.f32 %v806, %v868
    %v875 = vadd.f32 %v807, %v868
    %v876 = vadd.f32 %v808, %v868
    %v877 = vadd.f32 %v809, %v868
    %v878 = vadd.f32 %v810, %v868
    %v879 = vadd.f32 %v811, %v868
    %v880 = vadd.f32 %v812, %v868
    %v881 = vadd.f32 %v813, %v868
    %v882 = vadd.f32 %v814, %v868
    %v883 = vadd.f32 %v815, %v868
    %v884 = vadd.f32 %v816, %v868
    %v885 = vadd.f32 %v817, %v868
    %v886 = vadd.f32 %v818, %v868
    %v887 = vadd.f32 %v819, %v868
    %v888 = vadd.f32 %v820, %v868
    %v889 = vadd.f32 %v821, %v868
    %v890 = vadd.f32 %v822, %v868
    %v891 = vadd.f32 %v823, %v868
    %v892 = vadd.f32 %v824, %v868
    %v893 = vadd.f32 %v825, %v868
    %v894 = vadd.f32 %v826, %v868
    %v895 = vadd.f32 %v827, %v868
    %v896 = vadd.f32 %v828, %v868
    %v897 = vadd.f32 %v829, %v868
    %v898 = vadd.f32 %v830, %v868
    %v899 = vadd.f32 %v831, %v868
    %v900 = vadd.f32 %v832, %v868
    %v901 = vadd.f32 %v833, %v868
    %v902 = vadd.f32 %v834, %v868
    %v903 = vadd.f32 %v835, %v868
    %v904 = vadd.f32 %v836, %v868
    %v905 = vadd.f32 %v837, %v868
    %v906 = vadd.f32 %v838, %v868
    %v907 = vadd.f32 %v839, %v868
    %v908 = vadd.f32 %v840, %v868
    %v909 = vadd.f32 %v841, %v868
    %v910 = vadd.f32 %v842, %v868
    %v911 = vadd.f32 %v843, %v868
    %v912 = vadd.f32 %v844, %v868
    %v913 = vadd.f32 %v845, %v868
    %v914 = vadd.f32 %v846, %v868
    %v915 = vadd.f32 %v847, %v868
    %v916 = vadd.f32 %v848, %v868
    %v917 = vadd.f32 %v849, %v868
    %v918 = vadd.f32 %v850, %v868
    %v919 = vadd.f32 %v851, %v868
    %v920 = vadd.f32 %v852, %v868
    %v921 = vadd.f32 %v853, %v868
    %v922 = vadd.f32 %v854, %v868
    %v923 = vadd.f32 %v855, %v868
    %v924 = vadd.f32 %v856, %v868
    %v925 = vadd.f32 %v857, %v868
    %v926 = vadd.f32 %v858, %v868
    %v927 = vadd.f32 %v859, %v868
    %v928 = vadd.f32 %v860, %v868
    %v929 = vadd.f32 %v861, %v868
    %v930 = vadd.f32 %v862, %v868
    %v931 = vadd.f32 %v863, %v868
    %v932 = vadd.f32 %v864, %v868
    %v933 = vadd.f32 %v865, %v868
    %v934 = vmax.f32 %v870, 0.0
    %v935 = vmax.f32 %v871, 0.0
    %v936 = vmax.f32 %v872, 0.0
    %v937 = vmax.f32 %v873, 0.0
    %v938 = vmax.f32 %v874, 0.0
    %v939 = vmax.f32 %v875, 0.0
    %v940 = vmax.f32 %v876, 0.0
    %v941 = vmax.f32 %v877, 0.0
    %v942 = vmax.f32 %v878, 0.0
    %v943 = vmax.f32 %v879, 0.0
    %v944 = vmax.f32 %v880, 0.0
    %v945 = vmax.f32 %v881, 0.0
    %v946 = vmax.f32 %v882, 0.0
    %v947 = vmax.f32 %v883, 0.0
    %v948 = vmax.f32 %v884, 0.0
    %v949 = vmax.f32 %v885, 0.0
    %v950 = vmax.f32 %v886, 0.0
    %v951 = vmax.f32 %v887, 0.0
    %v952 = vmax.f32 %v888, 0.0
    %v953 = vmax.f32 %v889, 0.0
    %v954 = vmax.f32 %v890, 0.0
    %v955 = vmax.f32 %v891, 0.0
    %v956 = vmax.f32 %v892, 0.0
    %v957 = vmax.f32 %v893, 0.0
    %v958 = vmax.f32 %v894, 0.0
    %v959 = vmax.f32 %v895, 0.0
    %v960 = vmax.f32 %v896, 0.0
    %v961 = vmax.f32 %v897, 0.0
    %v962 = vmax.f32 %v898, 0.0
    %v963 = vmax.f32 %v899, 0.0
    %v964 = vmax.f32 %v900, 0.0
    %v965 = vmax.f32 %v901, 0.0
    %v966 = vmax.f32 %v902, 0.0
    %v967 = vmax.f32 %v903, 0.0
    %v968 = vmax.f32 %v904, 0.0
    %v969 = vmax.f32 %v905, 0.0
    %v970 = vmax.f32 %v906, 0.0
    %v971 = vmax.f32 %v907, 0.0
    %v972 = vmax.f32 %v908, 0.0
    %v973 = vmax.f32 %v909, 0.0
    %v974 = vmax.f32 %v910, 0.0
    %v975 = vmax.f32 %v911, 0.0
    %v976 = vmax.f32 %v912, 0.0
    %v977 = vmax.f32 %v913, 0.0
    %v978 = vmax.f32 %v914, 0.0
    %v979 = vmax.f32 %v915, 0.0
    %v980 = vmax.f32 %v916, 0.0
    %v981 = vmax.f32 %v917, 0.0
    %v982 = vmax.f32 %v918, 0.0
    %v983 = vmax.f32 %v919, 0.0
    %v984 = vmax.f32 %v920, 0.0
    %v985 = vmax.f32 %v921, 0.0
    %v986 = vmax.f32 %v922, 0.0
    %v987 = vmax.f32 %v923, 0.0
    %v988 = vmax.f32 %v924, 0.0
    %v989 = vmax.f32 %v925, 0.0
    %v990 = vmax.f32 %v926, 0.0
    %v991 = vmax.f32 %v927, 0.0
    %v992 = vmax.f32 %v928, 0.0
    %v993 = vmax.f32 %v929, 0.0
    %v994 = vmax.f32 %v930, 0.0
    %v995 = vmax.f32 %v931, 0.0
    %v996 = vmax.f32 %v932, 0.0
    %v997 = vmax.f32 %v933, 0.0
    %v998 = vpack.c.bf16 %v934, %v934
    %v999 = vpack.c.bf16 %v935, %v935
    %v1000 = vpack.c.bf16 %v936, %v936
    %v1001 = vpack.c.bf16 %v937, %v937
    %v1002 = vpack.c.bf16 %v938, %v938
    %v1003 = vpack.c.bf16 %v939, %v939
    %v1004 = vpack.c.bf16 %v940, %v940
    %v1005 = vpack.c.bf16 %v941, %v941
    %v1006 = vpack.c.bf16 %v942, %v942
    %v1007 = vpack.c.bf16 %v943, %v943
    %v1008 = vpack.c.bf16 %v944, %v944
    %v1009 = vpack.c.bf16 %v945, %v945
    %v1010 = vpack.c.bf16 %v946, %v946
    %v1011 = vpack.c.bf16 %v947, %v947
    %v1012 = vpack.c.bf16 %v948, %v948
    %v1013 = vpack.c.bf16 %v949, %v949
    %v1014 = vpack.c.bf16 %v950, %v950
    %v1015 = vpack.c.bf16 %v951, %v951
    %v1016 = vpack.c.bf16 %v952, %v952
    %v1017 = vpack.c.bf16 %v953, %v953
    %v1018 = vpack.c.bf16 %v954, %v954
    %v1019 = vpack.c.bf16 %v955, %v955
    %v1020 = vpack.c.bf16 %v956, %v956
    %v1021 = vpack.c.bf16 %v957, %v957
    %v1022 = vpack.c.bf16 %v958, %v958
    %v1023 = vpack.c.bf16 %v959, %v959
    %v1024 = vpack.c.bf16 %v960, %v960
    %v1025 = vpack.c.bf16 %v961, %v961
    %v1026 = vpack.c.bf16 %v962, %v962
    %v1027 = vpack.c.bf16 %v963, %v963
    %v1028 = vpack.c.bf16 %v964, %v964
    %v1029 = vpack.c.bf16 %v965, %v965
    %v1030 = vpack.c.bf16 %v966, %v966
    %v1031 = vpack.c.bf16 %v967, %v967
    %v1032 = vpack.c.bf16 %v968, %v968
    %v1033 = vpack.c.bf16 %v969, %v969
    %v1034 = vpack.c.bf16 %v970, %v970
    %v1035 = vpack.c.bf16 %v971, %v971
    %v1036 = vpack.c.bf16 %v972, %v972
    %v1037 = vpack.c.bf16 %v973, %v973
    %v1038 = vpack.c.bf16 %v974, %v974
    %v1039 = vpack.c.bf16 %v975, %v975
    %v1040 = vpack.c.bf16 %v976, %v976
    %v1041 = vpack.c.bf16 %v977, %v977
    %v1042 = vpack.c.bf16 %v978, %v978
    %v1043 = vpack.c.bf16 %v979, %v979
    %v1044 = vpack.c.bf16 %v980, %v980
    %v1045 = vpack.c.bf16 %v981, %v981
    %v1046 = vpack.c.bf16 %v982, %v982
    %v1047 = vpack.c.bf16 %v983, %v983
    %v1048 = vpack.c.bf16 %v984, %v984
    %v1049 = vpack.c.bf16 %v985, %v985
    %v1050 = vpack.c.bf16 %v986, %v986
    %v1051 = vpack.c.bf16 %v987, %v987
    %v1052 = vpack.c.bf16 %v988, %v988
    %v1053 = vpack.c.bf16 %v989, %v989
    %v1054 = vpack.c.bf16 %v990, %v990
    %v1055 = vpack.c.bf16 %v991, %v991
    %v1056 = vpack.c.bf16 %v992, %v992
    %v1057 = vpack.c.bf16 %v993, %v993
    %v1058 = vpack.c.bf16 %v994, %v994
    %v1059 = vpack.c.bf16 %v995, %v995
    %v1060 = vpack.c.bf16 %v996, %v996
    %v1061 = vpack.c.bf16 %v997, %v997
    %vm1062 = vcmask 125952
    %1063 = vst.msk [vmem:[%s3] sm:$0xf] %vm1062, %v998
    %1064 = vst.msk [vmem:[%s3 + $0x4] sm:$0xf] %vm1062, %v999
    %1065 = vst.msk [vmem:[%s3 + $0x8] sm:$0xf] %vm1062, %v1000
    %1066 = vst.msk [vmem:[%s3 + $0xc] sm:$0xf] %vm1062, %v1001
    %1067 = vst.msk [vmem:[%s3 + $0x10] sm:$0xf] %vm1062, %v1002
    %1068 = vst.msk [vmem:[%s3 + $0x14] sm:$0xf] %vm1062, %v1003
    %1069 = vst.msk [vmem:[%s3 + $0x18] sm:$0xf] %vm1062, %v1004
    %1070 = vst.msk [vmem:[%s3 + $0x1c] sm:$0xf] %vm1062, %v1005
    %1071 = vst.msk [vmem:[%s3 + $0x20] sm:$0xf] %vm1062, %v1006
    %1072 = vst.msk [vmem:[%s3 + $0x24] sm:$0xf] %vm1062, %v1007
    %1073 = vst.msk [vmem:[%s3 + $0x28] sm:$0xf] %vm1062, %v1008
    %1074 = vst.msk [vmem:[%s3 + $0x2c] sm:$0xf] %vm1062, %v1009
    %1075 = vst.msk [vmem:[%s3 + $0x30] sm:$0xf] %vm1062, %v1010
    %1076 = vst.msk [vmem:[%s3 + $0x34] sm:$0xf] %vm1062, %v1011
    %1077 = vst.msk [vmem:[%s3 + $0x38] sm:$0xf] %vm1062, %v1012
    %1078 = vst.msk [vmem:[%s3 + $0x3c] sm:$0xf] %vm1062, %v1013
    %1079 = vst.msk [vmem:[%s3 + $0x40] sm:$0xf] %vm1062, %v1014
    %1080 = vst.msk [vmem:[%s3 + $0x44] sm:$0xf] %vm1062, %v1015
    %1081 = vst.msk [vmem:[%s3 + $0x48] sm:$0xf] %vm1062, %v1016
    %1082 = vst.msk [vmem:[%s3 + $0x4c] sm:$0xf] %vm1062, %v1017
    %1083 = vst.msk [vmem:[%s3 + $0x50] sm:$0xf] %vm1062, %v1018
    %1084 = vst.msk [vmem:[%s3 + $0x54] sm:$0xf] %vm1062, %v1019
    %1085 = vst.msk [vmem:[%s3 + $0x58] sm:$0xf] %vm1062, %v1020
    %1086 = vst.msk [vmem:[%s3 + $0x5c] sm:$0xf] %vm1062, %v1021
    %1087 = vst.msk [vmem:[%s3 + $0x60] sm:$0xf] %vm1062, %v1022
    %1088 = vst.msk [vmem:[%s3 + $0x64] sm:$0xf] %vm1062, %v1023
    %1089 = vst.msk [vmem:[%s3 + $0x68] sm:$0xf] %vm1062, %v1024
    %1090 = vst.msk [vmem:[%s3 + $0x6c] sm:$0xf] %vm1062, %v1025
    %1091 = vst.msk [vmem:[%s3 + $0x70] sm:$0xf] %vm1062, %v1026
    %1092 = vst.msk [vmem:[%s3 + $0x74] sm:$0xf] %vm1062, %v1027
    %1093 = vst.msk [vmem:[%s3 + $0x78] sm:$0xf] %vm1062, %v1028
    %1094 = vst.msk [vmem:[%s3 + $0x7c] sm:$0xf] %vm1062, %v1029
    %1095 = vst.msk [vmem:[%s3 + $0x80] sm:$0xf] %vm1062, %v1030
    %1096 = vst.msk [vmem:[%s3 + $0x84] sm:$0xf] %vm1062, %v1031
    %1097 = vst.msk [vmem:[%s3 + $0x88] sm:$0xf] %vm1062, %v1032
    %1098 = vst.msk [vmem:[%s3 + $0x8c] sm:$0xf] %vm1062, %v1033
    %1099 = vst.msk [vmem:[%s3 + $0x90] sm:$0xf] %vm1062, %v1034
    %1100 = vst.msk [vmem:[%s3 + $0x94] sm:$0xf] %vm1062, %v1035
    %1101 = vst.msk [vmem:[%s3 + $0x98] sm:$0xf] %vm1062, %v1036
    %1102 = vst.msk [vmem:[%s3 + $0x9c] sm:$0xf] %vm1062, %v1037
    %1103 = vst.msk [vmem:[%s3 + $0xa0] sm:$0xf] %vm1062, %v1038
    %1104 = vst.msk [vmem:[%s3 + $0xa4] sm:$0xf] %vm1062, %v1039
    %1105 = vst.msk [vmem:[%s3 + $0xa8] sm:$0xf] %vm1062, %v1040
    %1106 = vst.msk [vmem:[%s3 + $0xac] sm:$0xf] %vm1062, %v1041
    %1107 = vst.msk [vmem:[%s3 + $0xb0] sm:$0xf] %vm1062, %v1042
    %1108 = vst.msk [vmem:[%s3 + $0xb4] sm:$0xf] %vm1062, %v1043
    %1109 = vst.msk [vmem:[%s3 + $0xb8] sm:$0xf] %vm1062, %v1044
    %1110 = vst.msk [vmem:[%s3 + $0xbc] sm:$0xf] %vm1062, %v1045
    %1111 = vst.msk [vmem:[%s3 + $0xc0] sm:$0xf] %vm1062, %v1046
    %1112 = vst.msk [vmem:[%s3 + $0xc4] sm:$0xf] %vm1062, %v1047
    %1113 = vst.msk [vmem:[%s3 + $0xc8] sm:$0xf] %vm1062, %v1048
    %1114 = vst.msk [vmem:[%s3 + $0xcc] sm:$0xf] %vm1062, %v1049
    %1115 = vst.msk [vmem:[%s3 + $0xd0] sm:$0xf] %vm1062, %v1050
    %1116 = vst.msk [vmem:[%s3 + $0xd4] sm:$0xf] %vm1062, %v1051
    %1117 = vst.msk [vmem:[%s3 + $0xd8] sm:$0xf] %vm1062, %v1052
    %1118 = vst.msk [vmem:[%s3 + $0xdc] sm:$0xf] %vm1062, %v1053
    %1119 = vst.msk [vmem:[%s3 + $0xe0] sm:$0xf] %vm1062, %v1054
    %1120 = vst.msk [vmem:[%s3 + $0xe4] sm:$0xf] %vm1062, %v1055
    %1121 = vst.msk [vmem:[%s3 + $0xe8] sm:$0xf] %vm1062, %v1056
    %1122 = vst.msk [vmem:[%s3 + $0xec] sm:$0xf] %vm1062, %v1057
    %1123 = vst.msk [vmem:[%s3 + $0xf0] sm:$0xf] %vm1062, %v1058
    %1124 = vst.msk [vmem:[%s3 + $0xf4] sm:$0xf] %vm1062, %v1059
    %1125 = vst.msk [vmem:[%s3 + $0xf8] sm:$0xf] %vm1062, %v1060
    %1126 = vst.msk [vmem:[%s3 + $0xfc] sm:$0xf] %vm1062, %v1061
  $region21: #{tpu_custom_call.1} parent=0 // pred_fallthru
    _
  // Predicated region
  $region22: #{tpu_custom_call.1} parent=0 // pred_check
    _
  $region23: #{tpu_custom_call.1} parent=0 // pred_check_branch
    %1128 = sbr.rel (0) target = $region25
  $region24: #{tpu_custom_call.1} parent=0 // pred_region
    _
  $region25: #{tpu_custom_call.1} parent=0 // pred_fallthru
    _
  // Predicated region
  $region26: #{tpu_custom_call.1} parent=0 // pred_check
    _
  $region27: #{tpu_custom_call.1} parent=0 // pred_check_branch
    %1130 = sbr.rel (0) target = $region29
  $region28: #{tpu_custom_call.1} parent=0 // pred_region
    _
  $region29: #{tpu_custom_call.1} parent=0 // pred_fallthru
    _

</llo_original>
